<compile_context>
chip_gen: v7x
topology: tpu7x:2x2x1
jax: 0.10.0
libtpu: 0.0.40
codegen_flags: <defaults>
</compile_context>

<pallas_src>
import functools

import jax
import jax.numpy as jnp
from jax.experimental import pallas as pl
from jax.experimental.pallas import tpu as pltpu


# ----------------------------- kernel ---------------------------------------


def _actor_kernel(state_ref, zs_ref,
                  w0_ref, b0_ref, w1_ref, b1_ref,
                  w2_ref, b2_ref, w3_ref, b3_ref,
                  out_ref, *, hdim):
    f32 = jnp.float32

    def mm(x, w):
        # MXU matmul in the weight dtype (bf16-friendly), f32 accumulation.
        return jnp.dot(x.astype(w.dtype), w, preferred_element_type=f32)

    state = state_ref[...]
    zs = zs_ref[...]

    # l0 + AvgL1Norm
    h = mm(state, w0_ref[...]) + b0_ref[...].astype(f32)
    denom = jnp.maximum(jnp.mean(jnp.abs(h), axis=-1, keepdims=True), 1e-8)
    h = h * pl.reciprocal(denom, approx=True)          # EUP, off the VALU path

    # cat([a, zs], 1) @ W1  ==  a @ W1[:hdim] + zs @ W1[hdim:]
    # (hdim is 8-aligned, so the sublane-axis ref slices are free.)
    h = mm(h, w1_ref[:hdim, :]) + mm(zs, w1_ref[hdim:, :]) + b1_ref[...].astype(f32)
    h = jnp.maximum(h, 0.0)                            # relu (default activ)

    h = mm(h, w2_ref[...]) + b2_ref[...].astype(f32)
    h = jnp.maximum(h, 0.0)

    a = mm(h, w3_ref[...]) + b3_ref[...].astype(f32)
    # TODO(synk): for very large batch, a lane-dense (action_dim, B) output
    # layout would avoid masked vst.msk stores; negligible at these sizes.
    out_ref[...] = jnp.tanh(a).astype(out_ref.dtype)


# ----------------------------- wrapper ---------------------------------------


def init_actor_params(key, state_dim, action_dim, zs_dim=256, hdim=256,
                      dtype=jnp.float32):
    """PyTorch-style uniform(+-1/sqrt(fan_in)) init; weights stored transposed
    as [in_features, out_features]."""
    dims = {
        "l0": (state_dim, hdim),
        "l1": (zs_dim + hdim, hdim),
        "l2": (hdim, hdim),
        "l3": (hdim, action_dim),
    }
    params = {}
    for name, (fan_in, fan_out) in dims.items():
        key, kw, kb = jax.random.split(key, 3)
        bound = 1.0 / float(fan_in) ** 0.5
        params[name + "_w"] = jax.random.uniform(
            kw, (fan_in, fan_out), dtype, -bound, bound)
        params[name + "_b"] = jax.random.uniform(
            kb, (1, fan_out), dtype, -bound, bound)
    return params


@functools.partial(jax.jit, static_argnames=("block_b",))
def actor_forward(params, state, zs, *, block_b=256):
    batch, state_dim = state.shape
    zs_dim = zs.shape[1]
    hdim = params["l0_w"].shape[1]
    action_dim = params["l3_w"].shape[1]
    dtype = state.dtype

    # Batch tile: one 8-aligned tile for small batches, block_b otherwise.
    tb = block_b if batch > block_b else max(8, ((batch + 7) // 8) * 8)
    pad = (-batch) % tb
    if pad:
        state = jnp.pad(state, ((0, pad), (0, 0)))
        zs = jnp.pad(zs, ((0, pad), (0, 0)))
    padded = batch + pad
    grid = (padded // tb,)

    weight_names = ("l0_w", "l0_b", "l1_w", "l1_b",
                    "l2_w", "l2_b", "l3_w", "l3_b")
    weights = tuple(params[n] for n in weight_names)

    def resident(arr):
        # Full-array block + constant index map: weight stays VMEM-resident
        # across batch tiles (no per-tile re-DMA).
        return pl.BlockSpec(arr.shape, lambda i, _nd=arr.ndim: (0,) * _nd)

    in_specs = [
        pl.BlockSpec((tb, state_dim), lambda i: (i, 0)),
        pl.BlockSpec((tb, zs_dim), lambda i: (i, 0)),
    ] + [resident(w) for w in weights]
    out_spec = pl.BlockSpec((tb, action_dim), lambda i: (i, 0))

    flops = 2 * padded * (state_dim * hdim + (hdim + zs_dim) * hdim
                          + hdim * hdim + hdim * action_dim)
    bytes_accessed = (
        sum(int(w.size) * w.dtype.itemsize for w in weights)
        + (int(state.size) + int(zs.size)) * state.dtype.itemsize
        + padded * action_dim * jnp.dtype(dtype).itemsize)
    transcendentals = padded * (action_dim + 1)        # tanh + reciprocal

    out = pl.pallas_call(
        functools.partial(_actor_kernel, hdim=hdim),
        out_shape=jax.ShapeDtypeStruct((padded, action_dim), dtype),
        grid=grid,
        in_specs=in_specs,
        out_specs=out_spec,
        compiler_params=pltpu.CompilerParams(
            dimension_semantics=("parallel",),          # v7x: 2 TCs share tiles
            vmem_limit_bytes=32 * 1024 * 1024,          # safe on v5e/v6e/v7x
        ),
        cost_estimate=pl.CostEstimate(
            flops=int(flops),
            transcendentals=int(transcendentals),
            bytes_accessed=int(bytes_accessed)),
    )(state, zs, *weights)

    return out[:batch]


# Pure-JAX reference for correctness checking.
def actor_reference(params, state, zs):
    def avg_l1_norm(x, eps=1e-8):
        return x / jnp.maximum(jnp.mean(jnp.abs(x), -1, keepdims=True), eps)

    a = avg_l1_norm(state @ params["l0_w"] + params["l0_b"])
    a = jnp.concatenate([a, zs], 1)
    a = jax.nn.relu(a @ params["l1_w"] + params["l1_b"])
    a = jax.nn.relu(a @ params["l2_w"] + params["l2_b"])
    return jnp.tanh(a @ params["l3_w"] + params["l3_b"])


if __name__ == "__main__":
    # Small, deterministic problem sizes consistent with the module.
    batch, state_dim, action_dim = 8, 16, 8
    zs_dim, hdim = 32, 32

    key = jax.random.PRNGKey(0)
    k_p, k_s, k_z = jax.random.split(key, 3)

    params = init_actor_params(k_p, state_dim, action_dim,
                               zs_dim=zs_dim, hdim=hdim)
    state = jax.random.normal(k_s, (batch, state_dim), jnp.float32)
    zs = jax.random.normal(k_z, (batch, zs_dim), jnp.float32)

    out = actor_forward(params, state, zs)
    out = jax.block_until_ready(out)

    ref = actor_reference(params, state, zs)
    assert out.shape == (batch, action_dim), out.shape
    assert bool(jnp.all(jnp.isfinite(out)))
    # Slightly loose tolerance: AvgL1Norm uses the EUP approximate reciprocal.
    max_err = float(jnp.max(jnp.abs(out - ref)))
    assert jnp.allclose(out, ref, atol=5e-3, rtol=5e-3), max_err

    print("KERNEL_OK")
</pallas_src>

<mosaic_0001>
module attributes {stable_mosaic.version = 11 : i64} {
  func.func @_actor_kernel(%arg0: i32, %arg1: memref<8x16xf32, #tpu.memory_space<vmem>>, %arg2: memref<8x32xf32, #tpu.memory_space<vmem>>, %arg3: memref<16x32xf32, #tpu.memory_space<vmem>>, %arg4: memref<1x32xf32, #tpu.memory_space<vmem>>, %arg5: memref<64x32xf32, #tpu.memory_space<vmem>>, %arg6: memref<1x32xf32, #tpu.memory_space<vmem>>, %arg7: memref<32x32xf32, #tpu.memory_space<vmem>>, %arg8: memref<1x32xf32, #tpu.memory_space<vmem>>, %arg9: memref<32x8xf32, #tpu.memory_space<vmem>>, %arg10: memref<1x8xf32, #tpu.memory_space<vmem>>, %arg11: memref<8x8xf32, #tpu.memory_space<vmem>>) attributes {dimension_semantics = [#tpu.dimension_semantics<parallel>], iteration_bounds = array<i64: 1>, scalar_prefetch = 0 : i64, scratch_operands = 0 : i64, tpu.core_type = #tpu.core_type<tc>, window_params = [{transform_indices = @transform_0, window_bounds = array<i64: 8, 16>}, {transform_indices = @transform_1, window_bounds = array<i64: 8, 32>}, {pipeline_mode = #tpu.pipeline_mode<synchronous>, transform_indices = @transform_2, window_bounds = array<i64: 16, 32>}, {pipeline_mode = #tpu.pipeline_mode<synchronous>, transform_indices = @transform_3, window_bounds = array<i64: 1, 32>}, {pipeline_mode = #tpu.pipeline_mode<synchronous>, transform_indices = @transform_4, window_bounds = array<i64: 64, 32>}, {pipeline_mode = #tpu.pipeline_mode<synchronous>, transform_indices = @transform_5, window_bounds = array<i64: 1, 32>}, {pipeline_mode = #tpu.pipeline_mode<synchronous>, transform_indices = @transform_6, window_bounds = array<i64: 32, 32>}, {pipeline_mode = #tpu.pipeline_mode<synchronous>, transform_indices = @transform_7, window_bounds = array<i64: 1, 32>}, {pipeline_mode = #tpu.pipeline_mode<synchronous>, transform_indices = @transform_8, window_bounds = array<i64: 32, 8>}, {pipeline_mode = #tpu.pipeline_mode<synchronous>, transform_indices = @transform_9, window_bounds = array<i64: 1, 8>}, {transform_indices = @transform_10, window_bounds = array<i64: 8, 8>}]} {
    %c0 = arith.constant 0 : index
    %c0_0 = arith.constant 0 : index
    %0 = vector.load %arg1[%c0, %c0_0] : memref<8x16xf32, #tpu.memory_space<vmem>>, vector<8x16xf32>
    %c0_1 = arith.constant 0 : index
    %c0_2 = arith.constant 0 : index
    %1 = vector.load %arg2[%c0_1, %c0_2] : memref<8x32xf32, #tpu.memory_space<vmem>>, vector<8x32xf32>
    %c0_3 = arith.constant 0 : index
    %c0_4 = arith.constant 0 : index
    %2 = vector.load %arg3[%c0_3, %c0_4] : memref<16x32xf32, #tpu.memory_space<vmem>>, vector<16x32xf32>
    %cst = arith.constant dense<0.000000e+00> : vector<8x32xf32>
    %3 = tpu.matmul %0, %2, %cst {dimension_numbers = #tpu.dot_dimension_numbers<[1], [0], [0], [1], [0, 0, 1, 1], [], []>} : vector<8x16xf32>, vector<16x32xf32>, vector<8x32xf32> -> vector<8x32xf32>
    %c0_5 = arith.constant 0 : index
    %c0_6 = arith.constant 0 : index
    %4 = vector.load %arg4[%c0_5, %c0_6] : memref<1x32xf32, #tpu.memory_space<vmem>>, vector<1x32xf32>
    %5 = vector.broadcast %4 : vector<1x32xf32> to vector<8x32xf32>
    %6 = arith.addf %3, %5 : vector<8x32xf32>
    %7 = math.absf %6 : vector<8x32xf32>
    %cst_7 = arith.constant dense<0.000000e+00> : vector<8xf32>
    %8 = vector.multi_reduction <add>, %7, %cst_7 [1] : vector<8x32xf32> to vector<8xf32>
    %9 = vector.shape_cast %8 : vector<8xf32> to vector<8x1xf32>
    %cst_8 = arith.constant 3.200000e+01 : f32
    %10 = vector.broadcast %cst_8 : f32 to vector<8x1xf32>
    %11 = arith.divf %9, %10 : vector<8x1xf32>
    %cst_9 = arith.constant 9.99999993E-9 : f32
    %12 = vector.broadcast %cst_9 : f32 to vector<8x1xf32>
    %13 = arith.maximumf %11, %12 : vector<8x1xf32>
    %14 = tpu.reciprocal %13 {approx = true} : vector<8x1xf32> -> vector<8x1xf32>
    %15 = vector.broadcast %14 : vector<8x1xf32> to vector<8x32xf32>
    %16 = arith.mulf %6, %15 : vector<8x32xf32>
    %c0_10 = arith.constant 0 : index
    %c0_11 = arith.constant 0 : index
    %17 = vector.load %arg5[%c0_10, %c0_11] : memref<64x32xf32, #tpu.memory_space<vmem>>, vector<32x32xf32>
    %cst_12 = arith.constant dense<0.000000e+00> : vector<8x32xf32>
    %18 = tpu.matmul %16, %17, %cst_12 {dimension_numbers = #tpu.dot_dimension_numbers<[1], [0], [0], [1], [0, 0, 1, 1], [], []>} : vector<8x32xf32>, vector<32x32xf32>, vector<8x32xf32> -> vector<8x32xf32>
    %c32 = arith.constant 32 : index
    %c0_13 = arith.constant 0 : index
    %19 = vector.load %arg5[%c32, %c0_13] : memref<64x32xf32, #tpu.memory_space<vmem>>, vector<32x32xf32>
    %cst_14 = arith.constant dense<0.000000e+00> : vector<8x32xf32>
    %20 = tpu.matmul %1, %19, %cst_14 {dimension_numbers = #tpu.dot_dimension_numbers<[1], [0], [0], [1], [0, 0, 1, 1], [], []>} : vector<8x32xf32>, vector<32x32xf32>, vector<8x32xf32> -> vector<8x32xf32>
    %21 = arith.addf %18, %20 : vector<8x32xf32>
    %c0_15 = arith.constant 0 : index
    %c0_16 = arith.constant 0 : index
    %22 = vector.load %arg6[%c0_15, %c0_16] : memref<1x32xf32, #tpu.memory_space<vmem>>, vector<1x32xf32>
    %23 = vector.broadcast %22 : vector<1x32xf32> to vector<8x32xf32>
    %24 = arith.addf %21, %23 : vector<8x32xf32>
    %cst_17 = arith.constant 0.000000e+00 : f32
    %25 = vector.broadcast %cst_17 : f32 to vector<8x32xf32>
    %26 = arith.maximumf %24, %25 : vector<8x32xf32>
    %c0_18 = arith.constant 0 : index
    %c0_19 = arith.constant 0 : index
    %27 = vector.load %arg7[%c0_18, %c0_19] : memref<32x32xf32, #tpu.memory_space<vmem>>, vector<32x32xf32>
    %cst_20 = arith.constant dense<0.000000e+00> : vector<8x32xf32>
    %28 = tpu.matmul %26, %27, %cst_20 {dimension_numbers = #tpu.dot_dimension_numbers<[1], [0], [0], [1], [0, 0, 1, 1], [], []>} : vector<8x32xf32>, vector<32x32xf32>, vector<8x32xf32> -> vector<8x32xf32>
    %c0_21 = arith.constant 0 : index
    %c0_22 = arith.constant 0 : index
    %29 = vector.load %arg8[%c0_21, %c0_22] : memref<1x32xf32, #tpu.memory_space<vmem>>, vector<1x32xf32>
    %30 = vector.broadcast %29 : vector<1x32xf32> to vector<8x32xf32>
    %31 = arith.addf %28, %30 : vector<8x32xf32>
    %cst_23 = arith.constant 0.000000e+00 : f32
    %32 = vector.broadcast %cst_23 : f32 to vector<8x32xf32>
    %33 = arith.maximumf %31, %32 : vector<8x32xf32>
    %c0_24 = arith.constant 0 : index
    %c0_25 = arith.constant 0 : index
    %34 = vector.load %arg9[%c0_24, %c0_25] : memref<32x8xf32, #tpu.memory_space<vmem>>, vector<32x8xf32>
    %cst_26 = arith.constant dense<0.000000e+00> : vector<8x8xf32>
    %35 = tpu.matmul %33, %34, %cst_26 {dimension_numbers = #tpu.dot_dimension_numbers<[1], [0], [0], [1], [0, 0, 1, 1], [], []>} : vector<8x32xf32>, vector<32x8xf32>, vector<8x8xf32> -> vector<8x8xf32>
    %c0_27 = arith.constant 0 : index
    %c0_28 = arith.constant 0 : index
    %36 = vector.load %arg10[%c0_27, %c0_28] : memref<1x8xf32, #tpu.memory_space<vmem>>, vector<1x8xf32>
    %37 = vector.broadcast %36 : vector<1x8xf32> to vector<8x8xf32>
    %38 = arith.addf %35, %37 : vector<8x8xf32>
    %39 = math.tanh %38 : vector<8x8xf32>
    %c0_29 = arith.constant 0 : index
    %c0_30 = arith.constant 0 : index
    %40 = vector.load %arg11[%c0_29, %c0_30] : memref<8x8xf32, #tpu.memory_space<vmem>>, vector<8x8xf32>
    tpu.vector_store %arg11[%c0_29, %c0_30], %39 {strides = array<i32>} : memref<8x8xf32, #tpu.memory_space<vmem>>, vector<8x8xf32>,
    return
  }
  func.func @transform_0(%arg0: i32) -> (i32, i32) {
    %c0_i32 = arith.constant 0 : i32
    %c0_i32_0 = arith.constant 0 : i32
    return %arg0, %c0_i32 : i32, i32
  }
  func.func @transform_1(%arg0: i32) -> (i32, i32) {
    %c0_i32 = arith.constant 0 : i32
    %c0_i32_0 = arith.constant 0 : i32
    return %arg0, %c0_i32 : i32, i32
  }
  func.func @transform_2(%arg0: i32) -> (i32, i32) {
    %c0_i32 = arith.constant 0 : i32
    %c0_i32_0 = arith.constant 0 : i32
    %c0_i32_1 = arith.constant 0 : i32
    return %c0_i32, %c0_i32_0 : i32, i32
  }
  func.func @transform_3(%arg0: i32) -> (i32, i32) {
    %c0_i32 = arith.constant 0 : i32
    %c0_i32_0 = arith.constant 0 : i32
    %c0_i32_1 = arith.constant 0 : i32
    return %c0_i32, %c0_i32_0 : i32, i32
  }
  func.func @transform_4(%arg0: i32) -> (i32, i32) {
    %c0_i32 = arith.constant 0 : i32
    %c0_i32_0 = arith.constant 0 : i32
    %c0_i32_1 = arith.constant 0 : i32
    return %c0_i32, %c0_i32_0 : i32, i32
  }
  func.func @transform_5(%arg0: i32) -> (i32, i32) {
    %c0_i32 = arith.constant 0 : i32
    %c0_i32_0 = arith.constant 0 : i32
    %c0_i32_1 = arith.constant 0 : i32
    return %c0_i32, %c0_i32_0 : i32, i32
  }
  func.func @transform_6(%arg0: i32) -> (i32, i32) {
    %c0_i32 = arith.constant 0 : i32
    %c0_i32_0 = arith.constant 0 : i32
    %c0_i32_1 = arith.constant 0 : i32
    return %c0_i32, %c0_i32_0 : i32, i32
  }
  func.func @transform_7(%arg0: i32) -> (i32, i32) {
    %c0_i32 = arith.constant 0 : i32
    %c0_i32_0 = arith.constant 0 : i32
    %c0_i32_1 = arith.constant 0 : i32
    return %c0_i32, %c0_i32_0 : i32, i32
  }
  func.func @transform_8(%arg0: i32) -> (i32, i32) {
    %c0_i32 = arith.constant 0 : i32
    %c0_i32_0 = arith.constant 0 : i32
    %c0_i32_1 = arith.constant 0 : i32
    return %c0_i32, %c0_i32_0 : i32, i32
  }
  func.func @transform_9(%arg0: i32) -> (i32, i32) {
    %c0_i32 = arith.constant 0 : i32
    %c0_i32_0 = arith.constant 0 : i32
    %c0_i32_1 = arith.constant 0 : i32
    return %c0_i32, %c0_i32_0 : i32, i32
  }
  func.func @transform_10(%arg0: i32) -> (i32, i32) {
    %c0_i32 = arith.constant 0 : i32
    %c0_i32_0 = arith.constant 0 : i32
    return %arg0, %c0_i32 : i32, i32
  }
}

</mosaic_0001>

<llo_original>
// kernel: actor_forward.1
$region0: #{actor_forward.1}
  #allocation0 [shape = 'u32[]', space=smem, size = 0x4, offset = 0x4, fixed_abs, tag = 'smem constant byte address 0x4 - core index']
  #allocation1 [shape = 'u32[144,128]{1,0:T(1,128)}', space=vmem, size = 0x12000, scoped, tag = 'internal scratch']
  %s0 = inlined_call_operand.vmem [shape: f32[8,16], index: 0, kind: input, shape index: {}]
  %s1 = inlined_call_operand.vmem [shape: f32[8,32], index: 1, kind: input, shape index: {}]
  %s2 = inlined_call_operand.vmem [shape: f32[16,32], index: 2, kind: input, shape index: {}]
  %s3 = inlined_call_operand.vmem [shape: f32[1,32], index: 3, kind: input, shape index: {}]
  %s4 = inlined_call_operand.vmem [shape: f32[64,32], index: 4, kind: input, shape index: {}]
  %s5 = inlined_call_operand.vmem [shape: f32[1,32], index: 5, kind: input, shape index: {}]
  %s6 = inlined_call_operand.vmem [shape: f32[32,32], index: 6, kind: input, shape index: {}]
  %s7 = inlined_call_operand.vmem [shape: f32[1,32], index: 7, kind: input, shape index: {}]
  %s8 = inlined_call_operand.vmem [shape: f32[32,8], index: 8, kind: input, shape index: {}]
  %s9 = inlined_call_operand.vmem [shape: f32[1,8], index: 9, kind: input, shape index: {}]
  %s10 = inlined_call_operand.hbm [shape: f32[8,8], index: 10, kind: output, shape index: {}]
  %s11 = sld [smem:[#allocation0]]
  $region50: #{actor_forward.1} parent=0
    _
  %s13 = ssub.s32 1, %s11
  %s14 = scalar_select 0, %s13, %s11
  $region1: #{actor_forward.1} parent=0
    #allocation2 [shape = 'u8[4096]{0}', space=vmem, size = 0x1000, scoped, tag = 'output window, operand 0, single buffered']
    #allocation3 [shape = 's32[1]{0}', space=sflag, size = 0x4, scoped, tag = 'scoped memory for actor_forward.1']
    %15 = vsyncpa [#allocation3], 0
    // Predicated region
    $region2: #{actor_forward.1} parent=1 // pred_check
      _
    $region3: #{actor_forward.1} parent=1 // pred_check_branch
      %17 = sbr.rel (0) target = $region5
    $region4: #{actor_forward.1} parent=1 // pred_region
      _
    $region5: #{actor_forward.1} parent=1 // pred_fallthru
      _
    // Predicated region
    $region6: #{actor_forward.1} parent=1 // pred_check
      _
    $region7: #{actor_forward.1} parent=1 // pred_check_branch
      %19 = sbr.rel (0) target = $region9
    $region8: #{actor_forward.1} parent=1 // pred_region
      _
    $region9: #{actor_forward.1} parent=1 // pred_fallthru
      _
    // Predicated region
    $region10: #{actor_forward.1} parent=1 // pred_check
      _
    $region11: #{actor_forward.1} parent=1 // pred_check_branch
      %21 = sbr.rel (0) target = $region13
    $region12: #{actor_forward.1} parent=1 // pred_region
      _
    $region13: #{actor_forward.1} parent=1 // pred_fallthru
      _
    // Predicated region
    $region14: #{actor_forward.1} parent=1 // pred_check
      _
    $region15: #{actor_forward.1} parent=1 // pred_check_branch
      %23 = sbr.rel (0) target = $region17
    $region16: #{actor_forward.1} parent=1 // pred_region
      _
    $region17: #{actor_forward.1} parent=1 // pred_fallthru
      _
    // Predicated region
    $region18: #{actor_forward.1} parent=1 // pred_check
      _
    $region19: #{actor_forward.1} parent=1 // pred_check_branch
      %25 = sbr.rel (0) target = $region21
    $region20: #{actor_forward.1} parent=1 // pred_region
      _
    $region21: #{actor_forward.1} parent=1 // pred_fallthru
      _
    // Predicated region
    $region22: #{actor_forward.1} parent=1 // pred_check
      _
    $region23: #{actor_forward.1} parent=1 // pred_check_branch
      %27 = sbr.rel (0) target = $region25
    $region24: #{actor_forward.1} parent=1 // pred_region
      _
    $region25: #{actor_forward.1} parent=1 // pred_fallthru
      _
    // Predicated region
    $region26: #{actor_forward.1} parent=1 // pred_check
      _
    $region27: #{actor_forward.1} parent=1 // pred_check_branch
      %29 = sbr.rel (0) target = $region29
    $region28: #{actor_forward.1} parent=1 // pred_region
      _
    $region29: #{actor_forward.1} parent=1 // pred_fallthru
      _
    // Predicated region
    $region30: #{actor_forward.1} parent=1 // pred_check
      _
    $region31: #{actor_forward.1} parent=1 // pred_check_branch
      %31 = sbr.rel (0) target = $region33
    $region32: #{actor_forward.1} parent=1 // pred_region
      _
    $region33: #{actor_forward.1} parent=1 // pred_fallthru
      _
    // Predicated region
    $region34: #{actor_forward.1} parent=1 // pred_check
      _
    $region35: #{actor_forward.1} parent=1 // pred_check_branch
      %33 = sbr.rel (0) target = $region37
    $region36: #{actor_forward.1} parent=1 // pred_region
      _
    $region37: #{actor_forward.1} parent=1 // pred_fallthru
      _
    // Predicated region
    $region38: #{actor_forward.1} parent=1 // pred_check
      _
    $region39: #{actor_forward.1} parent=1 // pred_check_branch
      %35 = sbr.rel (0) target = $region41
    $region40: #{actor_forward.1} parent=1 // pred_region
      _
    $region41: #{actor_forward.1} parent=1 // pred_fallthru
      _
    %v36 = vld [vmem:[%s0] sm:$0xff]
    %v37 = vld [vmem:[%s1] sm:$0xff]
    %v38 = vld [vmem:[%s2] sm:$0xff]
    %v39 = vld [vmem:[%s2 + $0x8] sm:$0xff]
    %v40 = vld [vmem:[%s3] sm:$0x1]
    %v42 = vlaneseq
    %v43 = vshrl.u32 %v42, 7
    %v44 = vsub.s32 0, %v43
    %v45 = vrot.slane %v40, %v44
    %vm47 = vcmask 130048
    %v49 = vsel %vm47, %v36, 0
    %51 = vmatprep.subr.mxu0 0.0
    %52 = vmatpush1.msra.mxu0 %v38
    %53 = vmatprep.subr.mxu0 0.0
    %54 = vmatpush1.msra.mxu0 %v39
    %55 = vmatprep.subr.mxu0 0.0
    %56 = vmatpush1.msra.mxu0 0.0
    %57 = vmatprep.subr.mxu0 0.0
    %58 = vmatpush1.msra.mxu0 0.0
    %59 = vmatprep.subr.mxu0 0.0
    %60 = vmatpush1.msra.mxu0 0.0
    %61 = vmatprep.subr.mxu0 0.0
    %62 = vmatpush1.msra.mxu0 0.0
    %63 = vmatprep.subr.mxu0 0.0
    %64 = vmatpush1.msra.mxu0 0.0
    %65 = vmatprep.subr.mxu0 0.0
    %66 = vmatpush1.msra.mxu0 0.0
    %67 = vmatprep.subr.mxu0 0.0
    %68 = vmatpush1.msra.mxu0 0.0
    %69 = vmatprep.subr.mxu0 0.0
    %70 = vmatpush1.msra.mxu0 0.0
    %71 = vmatprep.subr.mxu0 0.0
    %72 = vmatpush1.msra.mxu0 0.0
    %73 = vmatprep.subr.mxu0 0.0
    %74 = vmatpush1.msra.mxu0 0.0
    %75 = vmatprep.subr.mxu0 0.0
    %76 = vmatpush1.msra.mxu0 0.0
    %77 = vmatprep.subr.mxu0 0.0
    %78 = vmatpush1.msra.mxu0 0.0
    %79 = vmatprep.subr.mxu0 0.0
    %80 = vmatpush1.msra.mxu0 0.0
    %81 = vmatprep.subr.mxu0 0.0
    %82 = vmatpush1.msra.mxu0 0.0
    %83 = vmatprep.subr.mxu0 0.0
    %84 = vmatpush1.msra.mxu0 0.0
    %85 = vmatprep.subr.mxu0 0.0
    %86 = vmatpush1.msra.mxu0 0.0
    %87 = vmatprep.subr.mxu0 0.0
    %88 = vmatpush1.msra.mxu0 0.0
    %89 = vmatprep.subr.mxu0 0.0
    %90 = vmatpush1.msra.mxu0 0.0
    %91 = vmatprep.subr.mxu0 0.0
    %92 = vmatpush1.msra.mxu0 0.0
    %93 = vmatprep.subr.mxu0 0.0
    %94 = vmatpush1.msra.mxu0 0.0
    %95 = vmatprep.subr.mxu0 0.0
    %96 = vmatpush1.msra.mxu0 0.0
    %97 = vmatprep.subr.mxu0 0.0
    %98 = vmatpush1.msra.mxu0 0.0
    %99 = vmatprep.subr.mxu0 0.0
    %100 = vmatpush1.msra.mxu0 0.0
    %101 = vmatprep.subr.mxu0 0.0
    %102 = vmatpush1.msra.mxu0 0.0
    %103 = vmatprep.subr.mxu0 0.0
    %104 = vmatpush1.msra.mxu0 0.0
    %105 = vmatprep.subr.mxu0 0.0
    %106 = vmatpush1.msra.mxu0 0.0
    %107 = vmatprep.subr.mxu0 0.0
    %108 = vmatpush1.msra.mxu0 0.0
    %109 = vmatprep.subr.mxu0 0.0
    %110 = vmatpush1.msra.mxu0 0.0
    %111 = vmatprep.subr.mxu0 0.0
    %112 = vmatpush1.msra.mxu0 0.0
    %113 = vmatprep.subr.mxu0 0.0
    %114 = vmatpush1.msra.mxu0 0.0
    %115 = vmatprep.mubr.f32.mxu0 0.0
    %116 = vmatmul.mubr.f32.gmra.mrb[0].mxu0 %v49
    %v117 = vpop.f32.mrb[0].mxu0
    %v118 = vadd.f32 %v45, %v117
    %v119 = vpop.f32.mrb[0].mxu0
    %120 = vdwg.mxu0
    %v121 = vand.u32 2147483647, %v118
    %vm122 = vcmask 261120
    %v123 = vsel %vm122, %v121, 0.0
    %124 = vadd.xlane.f32.xlu0 %v123
    %v125 = vpop.xlane.xlu0 %124
    %v126 = vrcp.pop 32.0
    %v127 = vmul.f32 %v125, %v126
    %v128 = vmax.f32 %v127, 1e-08
    %v129 = vrcp.pop %v128
    %v130 = vmul.f32 %v118, %v129
    %v131 = vld [vmem:[%s4] sm:$0xff]
    %v132 = vld [vmem:[%s4 + $0x8] sm:$0xff]
    %v133 = vld [vmem:[%s4 + $0x10] sm:$0xff]
    %v134 = vld [vmem:[%s4 + $0x18] sm:$0xff]
    %v135 = vld [vmem:[%s4 + $0x20] sm:$0xff]
    %v136 = vld [vmem:[%s4 + $0x28] sm:$0xff]
    %v137 = vld [vmem:[%s4 + $0x30] sm:$0xff]
    %v138 = vld [vmem:[%s4 + $0x38] sm:$0xff]
    %v140 = vsel %vm122, %v37, 0
    %142 = vmatprep.subr.mxu0 0.0
    %143 = vmatpush1.msra.mxu0 %v135
    %144 = vmatprep.subr.mxu0 0.0
    %145 = vmatpush1.msra.mxu0 %v136
    %146 = vmatprep.subr.mxu0 0.0
    %147 = vmatpush1.msra.mxu0 %v137
    %148 = vmatprep.subr.mxu0 0.0
    %149 = vmatpush1.msra.mxu0 %v138
    %150 = vmatprep.subr.mxu0 0.0
    %151 = vmatpush1.msra.mxu0 0.0
    %152 = vmatprep.subr.mxu0 0.0
    %153 = vmatpush1.msra.mxu0 0.0
    %154 = vmatprep.subr.mxu0 0.0
    %155 = vmatpush1.msra.mxu0 0.0
    %156 = vmatprep.subr.mxu0 0.0
    %157 = vmatpush1.msra.mxu0 0.0
    %158 = vmatprep.subr.mxu0 0.0
    %159 = vmatpush1.msra.mxu0 0.0
    %160 = vmatprep.subr.mxu0 0.0
    %161 = vmatpush1.msra.mxu0 0.0
    %162 = vmatprep.subr.mxu0 0.0
    %163 = vmatpush1.msra.mxu0 0.0
    %164 = vmatprep.subr.mxu0 0.0
    %165 = vmatpush1.msra.mxu0 0.0
    %166 = vmatprep.subr.mxu0 0.0
    %167 = vmatpush1.msra.mxu0 0.0
    %168 = vmatprep.subr.mxu0 0.0
    %169 = vmatpush1.msra.mxu0 0.0
    %170 = vmatprep.subr.mxu0 0.0
    %171 = vmatpush1.msra.mxu0 0.0
    %172 = vmatprep.subr.mxu0 0.0
    %173 = vmatpush1.msra.mxu0 0.0
    %174 = vmatprep.subr.mxu0 0.0
    %175 = vmatpush1.msra.mxu0 0.0
    %176 = vmatprep.subr.mxu0 0.0
    %177 = vmatpush1.msra.mxu0 0.0
    %178 = vmatprep.subr.mxu0 0.0
    %179 = vmatpush1.msra.mxu0 0.0
    %180 = vmatprep.subr.mxu0 0.0
    %181 = vmatpush1.msra.mxu0 0.0
    %182 = vmatprep.subr.mxu0 0.0
    %183 = vmatpush1.msra.mxu0 0.0
    %184 = vmatprep.subr.mxu0 0.0
    %185 = vmatpush1.msra.mxu0 0.0
    %186 = vmatprep.subr.mxu0 0.0
    %187 = vmatpush1.msra.mxu0 0.0
    %188 = vmatprep.subr.mxu0 0.0
    %189 = vmatpush1.msra.mxu0 0.0
    %190 = vmatprep.subr.mxu0 0.0
    %191 = vmatpush1.msra.mxu0 0.0
    %192 = vmatprep.subr.mxu0 0.0
    %193 = vmatpush1.msra.mxu0 0.0
    %194 = vmatprep.subr.mxu0 0.0
    %195 = vmatpush1.msra.mxu0 0.0
    %196 = vmatprep.subr.mxu0 0.0
    %197 = vmatpush1.msra.mxu0 0.0
    %198 = vmatprep.subr.mxu0 0.0
    %199 = vmatpush1.msra.mxu0 0.0
    %200 = vmatprep.subr.mxu0 0.0
    %201 = vmatpush1.msra.mxu0 0.0
    %202 = vmatprep.subr.mxu0 0.0
    %203 = vmatpush1.msra.mxu0 0.0
    %204 = vmatprep.subr.mxu0 0.0
    %205 = vmatpush1.msra.mxu0 0.0
    %206 = vmatprep.mubr.f32.mxu0 0.0
    %207 = vmatmul.mubr.f32.gmra.mrb[0].mxu0 %v140
    %v208 = vpop.f32.mrb[0].mxu0
    %v209 = vadd.f32 0.0, %v208
    %v210 = vpop.f32.mrb[0].mxu0
    %211 = vdwg.mxu0
    %v213 = vsel %vm122, %v130, 0
    %215 = vmatprep.subr.mxu0 0.0
    %216 = vmatpush1.msra.mxu0 %v131
    %217 = vmatprep.subr.mxu0 0.0
    %218 = vmatpush1.msra.mxu0 %v132
    %219 = vmatprep.subr.mxu0 0.0
    %220 = vmatpush1.msra.mxu0 %v133
    %221 = vmatprep.subr.mxu0 0.0
    %222 = vmatpush1.msra.mxu0 %v134
    %223 = vmatprep.subr.mxu0 0.0
    %224 = vmatpush1.msra.mxu0 0.0
    %225 = vmatprep.subr.mxu0 0.0
    %226 = vmatpush1.msra.mxu0 0.0
    %227 = vmatprep.subr.mxu0 0.0
    %228 = vmatpush1.msra.mxu0 0.0
    %229 = vmatprep.subr.mxu0 0.0
    %230 = vmatpush1.msra.mxu0 0.0
    %231 = vmatprep.subr.mxu0 0.0
    %232 = vmatpush1.msra.mxu0 0.0
    %233 = vmatprep.subr.mxu0 0.0
    %234 = vmatpush1.msra.mxu0 0.0
    %235 = vmatprep.subr.mxu0 0.0
    %236 = vmatpush1.msra.mxu0 0.0
    %237 = vmatprep.subr.mxu0 0.0
    %238 = vmatpush1.msra.mxu0 0.0
    %239 = vmatprep.subr.mxu0 0.0
    %240 = vmatpush1.msra.mxu0 0.0
    %241 = vmatprep.subr.mxu0 0.0
    %242 = vmatpush1.msra.mxu0 0.0
    %243 = vmatprep.subr.mxu0 0.0
    %244 = vmatpush1.msra.mxu0 0.0
    %245 = vmatprep.subr.mxu0 0.0
    %246 = vmatpush1.msra.mxu0 0.0
    %247 = vmatprep.subr.mxu0 0.0
    %248 = vmatpush1.msra.mxu0 0.0
    %249 = vmatprep.subr.mxu0 0.0
    %250 = vmatpush1.msra.mxu0 0.0
    %251 = vmatprep.subr.mxu0 0.0
    %252 = vmatpush1.msra.mxu0 0.0
    %253 = vmatprep.subr.mxu0 0.0
    %254 = vmatpush1.msra.mxu0 0.0
    %255 = vmatprep.subr.mxu0 0.0
    %256 = vmatpush1.msra.mxu0 0.0
    %257 = vmatprep.subr.mxu0 0.0
    %258 = vmatpush1.msra.mxu0 0.0
    %259 = vmatprep.subr.mxu0 0.0
    %260 = vmatpush1.msra.mxu0 0.0
    %261 = vmatprep.subr.mxu0 0.0
    %262 = vmatpush1.msra.mxu0 0.0
    %263 = vmatprep.subr.mxu0 0.0
    %264 = vmatpush1.msra.mxu0 0.0
    %265 = vmatprep.subr.mxu0 0.0
    %266 = vmatpush1.msra.mxu0 0.0
    %267 = vmatprep.subr.mxu0 0.0
    %268 = vmatpush1.msra.mxu0 0.0
    %269 = vmatprep.subr.mxu0 0.0
    %270 = vmatpush1.msra.mxu0 0.0
    %271 = vmatprep.subr.mxu0 0.0
    %272 = vmatpush1.msra.mxu0 0.0
    %273 = vmatprep.subr.mxu0 0.0
    %274 = vmatpush1.msra.mxu0 0.0
    %275 = vmatprep.subr.mxu0 0.0
    %276 = vmatpush1.msra.mxu0 0.0
    %277 = vmatprep.subr.mxu0 0.0
    %278 = vmatpush1.msra.mxu0 0.0
    %279 = vmatprep.mubr.f32.mxu0 0.0
    %280 = vmatmul.mubr.f32.gmra.mrb[0].mxu0 %v213
    %v281 = vpop.f32.mrb[0].mxu0
    %v282 = vadd.f32 %v209, %v281
    %v283 = vpop.f32.mrb[0].mxu0
    %284 = vdwg.mxu0
    %v285 = vld [vmem:[%s5] sm:$0x1]
    %v287 = vlaneseq
    %v288 = vshrl.u32 %v287, 7
    %v289 = vsub.s32 0, %v288
    %v290 = vrot.slane %v285, %v289
    %v292 = vadd.f32 %v282, %v290
    %v293 = vmax.f32 %v292, 0.0
    %v294 = vld [vmem:[%s6] sm:$0xff]
    %v295 = vld [vmem:[%s6 + $0x8] sm:$0xff]
    %v296 = vld [vmem:[%s6 + $0x10] sm:$0xff]
    %v297 = vld [vmem:[%s6 + $0x18] sm:$0xff]
    %v298 = vld [vmem:[%s7] sm:$0x1]
    %v300 = vlaneseq
    %v301 = vshrl.u32 %v300, 7
    %v302 = vsub.s32 0, %v301
    %v303 = vrot.slane %v298, %v302
    %v306 = vsel %vm122, %v293, 0
    %308 = vmatprep.subr.mxu0 0.0
    %309 = vmatpush1.msra.mxu0 %v294
    %310 = vmatprep.subr.mxu0 0.0
    %311 = vmatpush1.msra.mxu0 %v295
    %312 = vmatprep.subr.mxu0 0.0
    %313 = vmatpush1.msra.mxu0 %v296
    %314 = vmatprep.subr.mxu0 0.0
    %315 = vmatpush1.msra.mxu0 %v297
    %316 = vmatprep.subr.mxu0 0.0
    %317 = vmatpush1.msra.mxu0 0.0
    %318 = vmatprep.subr.mxu0 0.0
    %319 = vmatpush1.msra.mxu0 0.0
    %320 = vmatprep.subr.mxu0 0.0
    %321 = vmatpush1.msra.mxu0 0.0
    %322 = vmatprep.subr.mxu0 0.0
    %323 = vmatpush1.msra.mxu0 0.0
    %324 = vmatprep.subr.mxu0 0.0
    %325 = vmatpush1.msra.mxu0 0.0
    %326 = vmatprep.subr.mxu0 0.0
    %327 = vmatpush1.msra.mxu0 0.0
    %328 = vmatprep.subr.mxu0 0.0
    %329 = vmatpush1.msra.mxu0 0.0
    %330 = vmatprep.subr.mxu0 0.0
    %331 = vmatpush1.msra.mxu0 0.0
    %332 = vmatprep.subr.mxu0 0.0
    %333 = vmatpush1.msra.mxu0 0.0
    %334 = vmatprep.subr.mxu0 0.0
    %335 = vmatpush1.msra.mxu0 0.0
    %336 = vmatprep.subr.mxu0 0.0
    %337 = vmatpush1.msra.mxu0 0.0
    %338 = vmatprep.subr.mxu0 0.0
    %339 = vmatpush1.msra.mxu0 0.0
    %340 = vmatprep.subr.mxu0 0.0
    %341 = vmatpush1.msra.mxu0 0.0
    %342 = vmatprep.subr.mxu0 0.0
    %343 = vmatpush1.msra.mxu0 0.0
    %344 = vmatprep.subr.mxu0 0.0
    %345 = vmatpush1.msra.mxu0 0.0
    %346 = vmatprep.subr.mxu0 0.0
    %347 = vmatpush1.msra.mxu0 0.0
    %348 = vmatprep.subr.mxu0 0.0
    %349 = vmatpush1.msra.mxu0 0.0
    %350 = vmatprep.subr.mxu0 0.0
    %351 = vmatpush1.msra.mxu0 0.0
    %352 = vmatprep.subr.mxu0 0.0
    %353 = vmatpush1.msra.mxu0 0.0
    %354 = vmatprep.subr.mxu0 0.0
    %355 = vmatpush1.msra.mxu0 0.0
    %356 = vmatprep.subr.mxu0 0.0
    %357 = vmatpush1.msra.mxu0 0.0
    %358 = vmatprep.subr.mxu0 0.0
    %359 = vmatpush1.msra.mxu0 0.0
    %360 = vmatprep.subr.mxu0 0.0
    %361 = vmatpush1.msra.mxu0 0.0
    %362 = vmatprep.subr.mxu0 0.0
    %363 = vmatpush1.msra.mxu0 0.0
    %364 = vmatprep.subr.mxu0 0.0
    %365 = vmatpush1.msra.mxu0 0.0
    %366 = vmatprep.subr.mxu0 0.0
    %367 = vmatpush1.msra.mxu0 0.0
    %368 = vmatprep.subr.mxu0 0.0
    %369 = vmatpush1.msra.mxu0 0.0
    %370 = vmatprep.subr.mxu0 0.0
    %371 = vmatpush1.msra.mxu0 0.0
    %372 = vmatprep.mubr.f32.mxu0 0.0
    %373 = vmatmul.mubr.f32.gmra.mrb[0].mxu0 %v306
    %v374 = vpop.f32.mrb[0].mxu0
    %v375 = vadd.f32 %v303, %v374
    %v376 = vpop.f32.mrb[0].mxu0
    %377 = vdwg.mxu0
    %v378 = vmax.f32 %v375, 0.0
    %v379 = vld [vmem:[%s8] sm:$0xff]
    %v380 = vld [vmem:[%s8 + $0x8] sm:$0xff]
    %v381 = vld [vmem:[%s8 + $0x10] sm:$0xff]
    %v382 = vld [vmem:[%s8 + $0x18] sm:$0xff]
    %v383 = vld [vmem:[%s9] sm:$0x1]
    %v385 = vlaneseq
    %v386 = vshrl.u32 %v385, 7
    %v387 = vsub.s32 0, %v386
    %v388 = vrot.slane %v383, %v387
    %v391 = vsel %vm122, %v378, 0
    %393 = vmatprep.subr.mxu0 0.0
    %394 = vmatpush1.msra.mxu0 %v379
    %395 = vmatprep.subr.mxu0 0.0
    %396 = vmatpush1.msra.mxu0 %v380
    %397 = vmatprep.subr.mxu0 0.0
    %398 = vmatpush1.msra.mxu0 %v381
    %399 = vmatprep.subr.mxu0 0.0
    %400 = vmatpush1.msra.mxu0 %v382
    %401 = vmatprep.subr.mxu0 0.0
    %402 = vmatpush1.msra.mxu0 0.0
    %403 = vmatprep.subr.mxu0 0.0
    %404 = vmatpush1.msra.mxu0 0.0
    %405 = vmatprep.subr.mxu0 0.0
    %406 = vmatpush1.msra.mxu0 0.0
    %407 = vmatprep.subr.mxu0 0.0
    %408 = vmatpush1.msra.mxu0 0.0
    %409 = vmatprep.subr.mxu0 0.0
    %410 = vmatpush1.msra.mxu0 0.0
    %411 = vmatprep.subr.mxu0 0.0
    %412 = vmatpush1.msra.mxu0 0.0
    %413 = vmatprep.subr.mxu0 0.0
    %414 = vmatpush1.msra.mxu0 0.0
    %415 = vmatprep.subr.mxu0 0.0
    %416 = vmatpush1.msra.mxu0 0.0
    %417 = vmatprep.subr.mxu0 0.0
    %418 = vmatpush1.msra.mxu0 0.0
    %419 = vmatprep.subr.mxu0 0.0
    %420 = vmatpush1.msra.mxu0 0.0
    %421 = vmatprep.subr.mxu0 0.0
    %422 = vmatpush1.msra.mxu0 0.0
    %423 = vmatprep.subr.mxu0 0.0
    %424 = vmatpush1.msra.mxu0 0.0
    %425 = vmatprep.subr.mxu0 0.0
    %426 = vmatpush1.msra.mxu0 0.0
    %427 = vmatprep.subr.mxu0 0.0
    %428 = vmatpush1.msra.mxu0 0.0
    %429 = vmatprep.subr.mxu0 0.0
    %430 = vmatpush1.msra.mxu0 0.0
    %431 = vmatprep.subr.mxu0 0.0
    %432 = vmatpush1.msra.mxu0 0.0
    %433 = vmatprep.subr.mxu0 0.0
    %434 = vmatpush1.msra.mxu0 0.0
    %435 = vmatprep.subr.mxu0 0.0
    %436 = vmatpush1.msra.mxu0 0.0
    %437 = vmatprep.subr.mxu0 0.0
    %438 = vmatpush1.msra.mxu0 0.0
    %439 = vmatprep.subr.mxu0 0.0
    %440 = vmatpush1.msra.mxu0 0.0
    %441 = vmatprep.subr.mxu0 0.0
    %442 = vmatpush1.msra.mxu0 0.0
    %443 = vmatprep.subr.mxu0 0.0
    %444 = vmatpush1.msra.mxu0 0.0
    %445 = vmatprep.subr.mxu0 0.0
    %446 = vmatpush1.msra.mxu0 0.0
    %447 = vmatprep.subr.mxu0 0.0
    %448 = vmatpush1.msra.mxu0 0.0
    %449 = vmatprep.subr.mxu0 0.0
    %450 = vmatpush1.msra.mxu0 0.0
    %451 = vmatprep.subr.mxu0 0.0
    %452 = vmatpush1.msra.mxu0 0.0
    %453 = vmatprep.subr.mxu0 0.0
    %454 = vmatpush1.msra.mxu0 0.0
    %455 = vmatprep.subr.mxu0 0.0
    %456 = vmatpush1.msra.mxu0 0.0
    %457 = vmatprep.mubr.f32.mxu0 0.0
    %458 = vmatmul.mubr.f32.gmra.mrb[0].mxu0 %v391
    %v459 = vpop.f32.mrb[0].mxu0
    %v460 = vadd.f32 %v388, %v459
    %v461 = vpop.f32.mrb[0].mxu0
    %462 = vdwg.mxu0
    %v463 = vtanh.pop %v460
    %vm464 = vcmask 64512
    %465 = vst.msk [vmem:[#allocation2] sm:$0xff] %vm464, %v463
    // Predicated region
    $region42: #{actor_forward.1} parent=1 // pred_check
      _
    $region43: #{actor_forward.1} parent=1 // pred_check_branch
      %467 = sbr.rel (0) target = $region45
    $region44: #{actor_forward.1} parent=1 // pred_region
      %s469 = ssub.s32 128, 128
      %470 = vsyncadd [#allocation3], %s469
      %s472 = sshll.u32 [#allocation2], 4
      %s473 = int_to_ptr.vmem [resolvable:$true] %s472
      %475 = dma.vmem_to_hbm [thread:$0]  %s473, 128, %s10, [#allocation3]
    $region45: #{actor_forward.1} parent=1 // pred_fallthru
      _
    // Predicated region
    $region46: #{actor_forward.1} parent=1 // pred_check
      _
    $region47: #{actor_forward.1} parent=1 // pred_check_branch
      %477 = sbr.rel (0) target = $region49
    $region48: #{actor_forward.1} parent=1 // pred_region
      %478 = dma.done [#allocation3], 128
    $region49: #{actor_forward.1} parent=1 // pred_fallthru
      _
    %479 = vsyncpa [#allocation3], 1

</llo_original>
